<compile_context>
chip_gen: v5e
topology: v5e:2x2
jax: 0.10.0
libtpu: 0.0.40
codegen_flags: <defaults>
</compile_context>

<pallas_src>
import jax
import jax.numpy as jnp
from jax import lax
from jax.experimental import pallas as pl
from jax.experimental.pallas import tpu as pltpu

_LANE = 128
_TARGET_BLOCK_BYTES = 8 * 1024 * 1024        # ~8 MiB per block buffer


def _sublane_multiple(itemsize):
    """Row granularity for packed sublanes: 8 (4-byte), 16 (2-byte), 32 (1-byte)."""
    if itemsize >= 4:
        return 8
    return 8 * (4 // itemsize)


def _mq_kernel(a2_ref, x_ref, o_ref):
    """o = rsqrt(1 + a^2 * x^2), computed in f32, cast on store."""
    a2 = a2_ref[0]                               # f32 scalar from SMEM
    x = x_ref[...].astype(jnp.float32)
    o_ref[...] = lax.rsqrt(1.0 + a2 * x * x).astype(o_ref.dtype)


def _compiler_args(block_bytes, n_elems, itemsize):
    # 2 input buffers + 2 output buffers (double-buffered) + headroom.
    vmem_limit = int(max(32 << 20, 4 * block_bytes + (4 << 20)))
    params = pltpu.CompilerParams(
        dimension_semantics=("parallel",),
        vmem_limit_bytes=vmem_limit)
    cost = pl.CostEstimate(
        flops=3 * n_elems,
        transcendentals=n_elems,
        bytes_accessed=2 * n_elems * itemsize)
    return params, cost


def _mq_2d(mat, a2_arr):
    """Kernel over a lane-dense 2D slab (rows, lanes); lanes % 128 == 0."""
    rows, lanes = mat.shape
    dtype = mat.dtype
    itemsize = jnp.dtype(dtype).itemsize
    sub = _sublane_multiple(itemsize)

    if rows <= sub:
        block_rows = rows                        # block == full row extent (allowed)
    else:
        target_rows = max(1, _TARGET_BLOCK_BYTES // (lanes * itemsize))
        block_rows = max(sub, (target_rows // sub) * sub)
        block_rows = min(block_rows, (rows // sub) * sub)
        # Even number of grid steps -> balanced 2-TC split on v7x; the extra
        # step is a negligible ~0.35 us on single-TC v5e/v6e.
        steps = pl.cdiv(rows, block_rows)
        if steps >= 3 and steps % 2 == 1:
            block_rows = max(sub, ((pl.cdiv(rows, steps + 1) + sub - 1) // sub) * sub)

    grid = (pl.cdiv(rows, block_rows),)          # ragged last block masked by Pallas
    block_bytes = block_rows * lanes * itemsize
    params, cost = _compiler_args(block_bytes, rows * lanes, itemsize)

    return pl.pallas_call(
        _mq_kernel,
        out_shape=jax.ShapeDtypeStruct((rows, lanes), dtype),
        grid=grid,
        in_specs=[
            pl.BlockSpec(memory_space=pltpu.MemorySpace.SMEM),       # a^2 (f32 scalar)
            pl.BlockSpec((block_rows, lanes), lambda i: (i, 0)),     # x tile
        ],
        out_specs=pl.BlockSpec((block_rows, lanes), lambda i: (i, 0)),
        compiler_params=params,
        cost_estimate=cost,
    )(a2_arr, mat)


def _mq_1d(vec, a2_arr):
    """1D-grid kernel for n % 128 != 0; ragged last block masked by Pallas."""
    n = vec.shape[0]
    dtype = vec.dtype
    itemsize = jnp.dtype(dtype).itemsize
    sub = _sublane_multiple(itemsize)
    granule = sub * _LANE                        # one packed (sublane, lane) tile
    target = max(granule, ((_TARGET_BLOCK_BYTES // itemsize) // granule) * granule)
    block_len = min(target, (n // granule) * granule)   # caller ensures n >= granule
    grid = (pl.cdiv(n, block_len),)
    block_bytes = block_len * itemsize
    params, cost = _compiler_args(block_bytes, n, itemsize)

    return pl.pallas_call(
        _mq_kernel,
        out_shape=jax.ShapeDtypeStruct((n,), dtype),
        grid=grid,
        in_specs=[
            pl.BlockSpec(memory_space=pltpu.MemorySpace.SMEM),
            pl.BlockSpec((block_len,), lambda i: (i,)),
        ],
        out_specs=pl.BlockSpec((block_len,), lambda i: (i,)),
        compiler_params=params,
        cost_estimate=cost,
    )(a2_arr, vec)


def multi_quadratic_activation(x, a):
    """y = 1 / sqrt(1 + (a*x)^2), elementwise, via a Pallas TPU kernel."""
    orig_shape = x.shape
    orig_dtype = x.dtype

    a_f32 = jnp.asarray(a, dtype=jnp.float32).reshape(-1)[0]

    def _jax_ref(v):
        z = a_f32 * v.astype(jnp.float32)
        y = lax.rsqrt(1.0 + z * z)
        out_dt = orig_dtype if jnp.issubdtype(orig_dtype, jnp.floating) else jnp.float32
        return y.astype(out_dt)

    # Kernel path only for <=32-bit floating dtypes; f64 (no TPU support) and
    # integer inputs go through the (single fused) JAX expression.
    if (not jnp.issubdtype(orig_dtype, jnp.floating)
            or jnp.dtype(orig_dtype).itemsize > 4):
        return _jax_ref(x)

    flat = x.reshape(-1)
    n = flat.shape[0]
    itemsize = jnp.dtype(orig_dtype).itemsize
    sub = _sublane_multiple(itemsize)

    if n < sub * _LANE:                          # tiny input: one fused JAX op
        return _jax_ref(flat).reshape(orig_shape)

    a2_arr = (a_f32 * a_f32).reshape(1)

    if n % _LANE != 0:
        # Ragged element count (rare): 1D grid over the whole flat array,
        # masked ragged last block -- no pad / slice / concatenate.
        return _mq_1d(flat, a2_arr).reshape(orig_shape)

    # Common path: lane-dense 2D slab.  Prefer the widest lane extent that
    # still leaves at least two sublane-aligned row blocks (so v7x's two
    # TensorCores both get work); else the widest that divides evenly.
    lanes = _LANE
    chosen = None
    for cand in (4096, 2048, 1024, 512, 256, 128):
        if n % cand == 0 and (n // cand) >= 2 * sub:
            chosen = cand
            break
    if chosen is None:
        for cand in (4096, 2048, 1024, 512, 256, 128):
            if n % cand == 0:
                chosen = cand
                break
    lanes = chosen
    rows = n // lanes

    return _mq_2d(flat.reshape(rows, lanes), a2_arr).reshape(orig_shape)


if __name__ == "__main__":
    key = jax.random.PRNGKey(0)
    # NCHW input consistent with a conv-style feature map.
    x = jax.random.normal(key, (2, 4, 16, 16), dtype=jnp.float32)

    # Deterministic parameter init, matching nn.Parameter(a * torch.ones(1)) with a=1.0.
    a_param = jnp.ones((1,), dtype=jnp.float32)

    y = multi_quadratic_activation(x, a_param)
    jax.block_until_ready(y)

    # Reference check in plain JAX.
    y_ref = 1.0 / jnp.sqrt(1.0 + (a_param[0] * x) ** 2)
    assert y.shape == x.shape and y.dtype == x.dtype
    assert jnp.allclose(y, y_ref, atol=1e-5, rtol=1e-5)

    print("KERNEL_OK")
</pallas_src>

<mosaic_0001>
module attributes {stable_mosaic.version = 11 : i64} {
  func.func @_mq_kernel(%arg0: i32, %arg1: memref<1xf32, #tpu.memory_space<smem>>, %arg2: memref<16x128xf32, #tpu.memory_space<vmem>>, %arg3: memref<16x128xf32, #tpu.memory_space<vmem>>) attributes {dimension_semantics = [#tpu.dimension_semantics<parallel>], iteration_bounds = array<i64: 1>, scalar_prefetch = 0 : i64, scratch_operands = 0 : i64, tpu.core_type = #tpu.core_type<tc>, window_params = [{transform_indices = @transform_0, window_bounds = array<i64: 1>}, {transform_indices = @transform_1, window_bounds = array<i64: 16, 128>}, {transform_indices = @transform_2, window_bounds = array<i64: 16, 128>}]} {
    %c0 = arith.constant 0 : index
    %0 = memref.load %arg1[%c0] : memref<1xf32, #tpu.memory_space<smem>>
    %c0_0 = arith.constant 0 : index
    %c0_1 = arith.constant 0 : index
    %1 = vector.load %arg2[%c0_0, %c0_1] : memref<16x128xf32, #tpu.memory_space<vmem>>, vector<16x128xf32>
    %2 = vector.broadcast %0 : f32 to vector<16x128xf32>
    %3 = arith.mulf %2, %1 : vector<16x128xf32>
    %4 = arith.mulf %3, %1 : vector<16x128xf32>
    %cst = arith.constant 1.000000e+00 : f32
    %5 = vector.broadcast %cst : f32 to vector<16x128xf32>
    %6 = arith.addf %5, %4 : vector<16x128xf32>
    %7 = math.rsqrt %6 : vector<16x128xf32>
    %c0_2 = arith.constant 0 : index
    %c0_3 = arith.constant 0 : index
    %8 = vector.load %arg3[%c0_2, %c0_3] : memref<16x128xf32, #tpu.memory_space<vmem>>, vector<16x128xf32>
    tpu.vector_store %arg3[%c0_2, %c0_3], %7 {strides = array<i32>} : memref<16x128xf32, #tpu.memory_space<vmem>>, vector<16x128xf32>,
    return
  }
  func.func @transform_0(%arg0: i32) -> i32 {
    %c0_i32 = arith.constant 0 : i32
    %c0_i32_0 = arith.constant 0 : i32
    return %c0_i32 : i32
  }
  func.func @transform_1(%arg0: i32) -> (i32, i32) {
    %c0_i32 = arith.constant 0 : i32
    %c0_i32_0 = arith.constant 0 : i32
    return %arg0, %c0_i32 : i32, i32
  }
  func.func @transform_2(%arg0: i32) -> (i32, i32) {
    %c0_i32 = arith.constant 0 : i32
    %c0_i32_0 = arith.constant 0 : i32
    return %arg0, %c0_i32 : i32, i32
  }
}

</mosaic_0001>

<llo_original>
// kernel: tpu_custom_call.1
$region0: #{tpu_custom_call.1}
  #allocation0 [shape = 'u32[]', space=smem, size = 0x4, offset = 0x4, fixed_abs, tag = 'smem constant byte address 0x4 - core index']
  #allocation1 [shape = 'u32[72,128]{1,0:T(1,128)}', space=vmem, size = 0x9000, scoped, tag = 'internal scratch']
  #allocation2 [shape = 'f32[1]{0:T(128)S(6)}', space=smem, size = 0x200, scoped, tag = 'scoped memory for tpu_custom_call.1']
  %s0 = inlined_call_operand.<no memory space> [shape: f32[1], index: 0, kind: input, shape index: {}]
  %s1 = inlined_call_operand.hbm [shape: f32[16,128], index: 1, kind: input, shape index: {}]
  %s2 = inlined_call_operand.hbm [shape: f32[16,128], index: 2, kind: output, shape index: {}]
  %s3 = sld [smem:[#allocation0]]
  $region22: #{tpu_custom_call.1} parent=0
    _
  %s5 = ssub.s32 1, %s3
  %s6 = scalar_select 0, %s5, %s3
  %7 = sst [smem:[#allocation2]] %s0
  $region1: #{tpu_custom_call.1} parent=0
    #allocation3 [shape = 'u8[8192]{0}', space=vmem, size = 0x2000, scoped, tag = 'input window, operand 1, single buffered']
    #allocation4 [shape = 's32[1]{0}', space=sflag, size = 0x4, scoped, tag = 'scoped memory for tpu_custom_call.1']
    #allocation5 [shape = 's32[1]{0}', space=sflag, size = 0x4, scoped, tag = 'scoped memory for tpu_custom_call.1']
    #allocation6 [shape = 'u8[8192]{0}', space=vmem, size = 0x2000, scoped, tag = 'output window, operand 0, single buffered']
    %8 = vsyncpa [#allocation4], 0
    %9 = vsyncpa [#allocation5], 0
    // Predicated region
    $region2: #{tpu_custom_call.1} parent=1 // pred_check
      _
    $region3: #{tpu_custom_call.1} parent=1 // pred_check_branch
      %11 = sbr.rel (0) target = $region5
    $region4: #{tpu_custom_call.1} parent=1 // pred_region
      _
    $region5: #{tpu_custom_call.1} parent=1 // pred_fallthru
      _
    // Predicated region
    $region6: #{tpu_custom_call.1} parent=1 // pred_check
      _
    $region7: #{tpu_custom_call.1} parent=1 // pred_check_branch
      %13 = sbr.rel (0) target = $region9
    $region8: #{tpu_custom_call.1} parent=1 // pred_region
      %15 = vsyncadd [#allocation4], 0
      %s16 = sshll.u32 %s1, 4
      %s17 = int_to_ptr.hbm [resolvable:$true] %s16
      %s18 = sshll.u32 [#allocation3], 4
      %s19 = int_to_ptr.vmem [resolvable:$true] %s18
      %24 = dma.hbm_to_vmem [thread:$0]  %s17, 256, %s19, [#allocation4], 128, 128, 8
    $region9: #{tpu_custom_call.1} parent=1 // pred_fallthru
      _
    // Predicated region
    $region10: #{tpu_custom_call.1} parent=1 // pred_check
      _
    $region11: #{tpu_custom_call.1} parent=1 // pred_check_branch
      %26 = sbr.rel (0) target = $region13
    $region12: #{tpu_custom_call.1} parent=1 // pred_region
      %28 = dma.done [#allocation4], 256
    $region13: #{tpu_custom_call.1} parent=1 // pred_fallthru
      _
    %s29 = sld [smem:[#allocation2]]
    %v30 = vld [vmem:[#allocation3] sm:$0xff]
    %v31 = vld [vmem:[#allocation3 + $0x8] sm:$0xff]
    %v32 = vstv %s29
    %v33 = vmul.f32 %v32, %v30
    %v34 = vmul.f32 %v32, %v31
    %v35 = vmul.f32 %v33, %v30
    %v36 = vmul.f32 %v34, %v31
    %v37 = vadd.f32 %v35, 1.0
    %v38 = vadd.f32 %v36, 1.0
    %v39 = vrsqrt.pop %v37
    %v40 = vmul.f32 %v39, %v37
    %v41 = vmul.f32 %v40, %v39
    %v42 = vmul.f32 0.5, %v41
    %v43 = vsub.f32 1.5, %v42
    %v44 = vmul.f32 %v39, %v43
    %vm45 = vweird.f32 %v37
    %vm46 = vweird.f32 %v39
    %vm47 = vmor %vm45, %vm46
    %v48 = vsel %vm47, %v39, %v44
    %v49 = vrsqrt.pop %v38
    %v50 = vmul.f32 %v49, %v38
    %v51 = vmul.f32 %v50, %v49
    %v52 = vmul.f32 0.5, %v51
    %v53 = vsub.f32 1.5, %v52
    %v54 = vmul.f32 %v49, %v53
    %vm55 = vweird.f32 %v38
    %vm56 = vweird.f32 %v49
    %vm57 = vmor %vm55, %vm56
    %v58 = vsel %vm57, %v49, %v54
    %59 = vst [vmem:[#allocation6] sm:$0xff] %v48
    %60 = vst [vmem:[#allocation6 + $0x8] sm:$0xff] %v58
    // Predicated region
    $region14: #{tpu_custom_call.1} parent=1 // pred_check
      _
    $region15: #{tpu_custom_call.1} parent=1 // pred_check_branch
      %62 = sbr.rel (0) target = $region17
    $region16: #{tpu_custom_call.1} parent=1 // pred_region
      %64 = vsyncadd [#allocation5], 0
      %s65 = sshll.u32 [#allocation6], 4
      %s66 = int_to_ptr.vmem [resolvable:$true] %s65
      %s67 = sshll.u32 %s2, 4
      %s68 = int_to_ptr.hbm [resolvable:$true] %s67
      %73 = dma.vmem_to_hbm [thread:$0]  %s66, 256, %s68, [#allocation5], 128, 128, 8
    $region17: #{tpu_custom_call.1} parent=1 // pred_fallthru
      _
    // Predicated region
    $region18: #{tpu_custom_call.1} parent=1 // pred_check
      _
    $region19: #{tpu_custom_call.1} parent=1 // pred_check_branch
      %75 = sbr.rel (0) target = $region21
    $region20: #{tpu_custom_call.1} parent=1 // pred_region
      %77 = dma.done [#allocation5], 256
    $region21: #{tpu_custom_call.1} parent=1 // pred_fallthru
      _
    %78 = vsyncpa [#allocation4], 1
    %79 = vsyncpa [#allocation5], 1

</llo_original>
